<compile_context>
chip_gen: v5e
topology: v5e:2x2
jax: 0.10.0
libtpu: 0.0.40
codegen_flags: <defaults>
</compile_context>

<pallas_src>
import jax
import jax.numpy as jnp
from jax.experimental import pallas as pl
from jax.experimental.pallas import tpu as pltpu


def _attention_sample_kernel(x_ref, w_ref, b_ref, out_ref, alpha_ref, ybeta_ref):
    # x_ref:     (Bt, C, N)   N (=H*W) in lanes, C in sublanes
    # w_ref:     (F, C)
    # b_ref:     (1, F)
    # out_ref:   (Bt, C, 1)
    # alpha_ref: (Bt, 1, N)
    # ybeta_ref: (Bt, N, F)   final (B, N, F) layout, written to HBM once
    x = x_ref[...]                                              # (Bt, C, N) f32
    w = w_ref[...]                                              # (F, C)
    b = b_ref[...]                                              # (1, F)
    Bt, C, N = x.shape
    Fo = w.shape[0]

    # ---- y_beta[i] = x[i]^T w^T + b, stored directly in (N, F) orientation ----
    use_mxu = (C > 8) or (Fo >= 8)
    if use_mxu:
        # Lane-dense MXU matmul (F, C) @ (C, N); the small in-VMEM XLU transpose
        # replaces the old full-HBM wrapper transpose of y_beta.
        for i in range(Bt):
            yb = jnp.dot(w, x[i], preferred_element_type=jnp.float32)   # (F, N)
            ybeta_ref[i] = (yb.T + b).astype(ybeta_ref.dtype)           # (N, F)
    else:
        # Truly tiny C and F: C broadcast-FMAs on the VPU (lane-dense over N).
        # w-column broadcasts are hoisted out of the loops (no re-materialized
        # broadcast_in_dim) and x rows come in as stride-0 sublane-broadcast
        # loads, riding the under-used vld slot.
        w_cols = [jnp.broadcast_to(w[:, c:c + 1], (Fo, N)) for c in range(C)]
        for i in range(Bt):
            acc = jnp.zeros((Fo, N), jnp.float32)
            for c in range(C):
                xc = x_ref[i, pl.ds(c, Fo, stride=0), :]        # row c -> (Fo, N)
                acc = acc + w_cols[c] * xc
            ybeta_ref[i] = (acc.T + b).astype(ybeta_ref.dtype)  # (N, F)

    # ---- alpha: thresholded, renormalized L2 column norms (gamma = N) ----
    alpha = jnp.sqrt(jnp.sum(x * x, axis=1, keepdims=True))     # (Bt, 1, N)
    s1 = jnp.sum(alpha, axis=2, keepdims=True)                  # (Bt, 1, 1)
    alpha = alpha * (1.0 / s1)
    alpha = jnp.maximum(alpha - jnp.float32(0.1 / N), 0.0)
    s2 = jnp.sum(alpha, axis=2, keepdims=True)
    alpha = alpha * (1.0 / s2)
    alpha_ref[...] = alpha.astype(alpha_ref.dtype)

    # ---- out[b, c] = sum_n alpha[b, n] * x[b, c, n] ----
    out_ref[...] = jnp.sum(alpha * x, axis=2, keepdims=True).astype(out_ref.dtype)


def _tpu_generation_params():
    """Returns (per-block VMEM budget, vmem_limit_bytes, prefer_even_grid_steps)."""
    cap = None
    try:
        info = pltpu.get_tpu_info()
        cap = getattr(info, "vmem_capacity_bytes", None)
    except Exception:
        cap = None
    if cap is None:
        cap = 128 * 1024 * 1024
    if cap <= 64 * 1024 * 1024:
        # v7x-class: 64 MiB VMEM per TensorCore, 2 TCs/chip -> smaller blocks,
        # even number of grid steps so both cores get equal work.
        return 24 << 20, 32 << 20, True
    # v5e / v6e: 128 MiB VMEM, single TensorCore -> biggest block, fewest steps.
    return 48 << 20, 64 << 20, False


def _pick_block_batches(B, C, N, F_out, budget_bytes, prefer_even_steps):
    """Largest Bt dividing B whose (padded, double-buffered) block fits the budget."""
    def pad(v, m):
        return ((v + m - 1) // m) * m

    per_batch = 4 * (
        pad(C, 8) * pad(N, 128)           # x input block
        + pad(N, 8) * pad(F_out, 128)     # y_beta output block (F in lanes)
        + 8 * pad(N, 128)                 # alpha output block
        + pad(C, 8) * 128                 # out output block
    )
    per_batch *= 2                        # pipeline double-buffering
    max_bt = max(1, budget_bytes // per_batch)

    divisors = [bt for bt in range(1, B + 1) if B % bt == 0 and bt <= max_bt]
    if not divisors:
        # A single batch does not fit the budget; fall back to Bt=1.
        # (An N-tiled two-pass alpha would be needed to go below one batch.)
        return 1
    if prefer_even_steps:
        even = [bt for bt in divisors if (B // bt) % 2 == 0]
        if even:
            divisors = even
    return max(divisors)


def attention_sample(x, w, b, ybeta_dtype=jnp.float32):
    """x: (B, C, H, W) f32, w: (F, C) f32, b: (F,) f32
       -> (out (B, C), alpha (B, N), y_beta (B, N, F))"""
    B, C, H, W = x.shape
    N = H * W
    F_out = w.shape[0]

    x_cn = x.reshape(B, C, N)          # pure reshape of NCHW, no wrapper transpose
    b2 = b.reshape(1, F_out)

    budget, vmem_limit, prefer_even = _tpu_generation_params()
    Bt = _pick_block_batches(B, C, N, F_out, budget, prefer_even)
    grid = (B // Bt,)

    cost = pl.CostEstimate(
        flops=2 * B * F_out * C * N + 6 * B * C * N,
        transcendentals=B * N,                              # sqrt per spatial position
        bytes_accessed=4 * (B * (C * N + F_out * N + N + C) + F_out * C + F_out),
    )

    out_c1, alpha_1n, y_beta = pl.pallas_call(
        _attention_sample_kernel,
        out_shape=(
            jax.ShapeDtypeStruct((B, C, 1), jnp.float32),
            jax.ShapeDtypeStruct((B, 1, N), jnp.float32),
            jax.ShapeDtypeStruct((B, N, F_out), ybeta_dtype),
        ),
        grid_spec=pltpu.PrefetchScalarGridSpec(
            num_scalar_prefetch=0,
            grid=grid,
            in_specs=[
                pl.BlockSpec((Bt, C, N), lambda i: (i, 0, 0)),
                pl.BlockSpec((F_out, C), lambda i: (0, 0)),   # tiny, constant block
                pl.BlockSpec((1, F_out), lambda i: (0, 0)),   # tiny, constant block
            ],
            out_specs=[
                pl.BlockSpec((Bt, C, 1), lambda i: (i, 0, 0)),
                pl.BlockSpec((Bt, 1, N), lambda i: (i, 0, 0)),
                pl.BlockSpec((Bt, N, F_out), lambda i: (i, 0, 0)),
            ],
        ),
        compiler_params=pltpu.CompilerParams(
            dimension_semantics=("parallel",),
            vmem_limit_bytes=vmem_limit,
        ),
        cost_estimate=cost,
    )(x_cn, w, b2)

    out = out_c1.reshape(B, C)        # free reshape (contiguous)
    alpha = alpha_1n.reshape(B, N)    # free reshape (contiguous)
    return out, alpha, y_beta         # y_beta already (B, N, F): no XLA transpose


def _reference(x, w, b):
    B, C, H, W = x.shape
    N = H * W
    xf = jnp.transpose(x.reshape(B, C, N), (0, 2, 1))          # (B, N, C)
    y_beta = jnp.einsum("bnc,fc->bnf", xf, w,
                        precision=jax.lax.Precision.HIGHEST) + b
    alpha = jnp.sqrt(jnp.sum(xf ** 2, axis=2))
    alpha = alpha / jnp.sum(alpha, axis=1, keepdims=True)
    alpha = jnp.maximum(alpha - 0.1 / float(N), 0.0)
    alpha = alpha / jnp.sum(alpha, axis=1, keepdims=True)
    out = jnp.sum(alpha[..., None] * xf, axis=1)
    return out, alpha, y_beta


if __name__ == "__main__":
    def _run_case(key, B, C, H, W, F_out):
        kx, kw, kb = jax.random.split(key, 3)
        # Inputs are rounded to bf16-representable f32 values so the kernel vs.
        # reference comparison is insensitive to the MXU's f32 pass decomposition
        # (bf16-exact inputs make the matmul products exact in f32).
        x = jax.random.normal(kx, (B, C, H, W), dtype=jnp.float32)
        x = x.astype(jnp.bfloat16).astype(jnp.float32)
        w = (jax.random.normal(kw, (F_out, C), dtype=jnp.float32) * 0.1)
        w = w.astype(jnp.bfloat16).astype(jnp.float32)
        b = (jax.random.normal(kb, (F_out,), dtype=jnp.float32) * 0.1)
        b = b.astype(jnp.bfloat16).astype(jnp.float32)

        out, alpha, y_beta = attention_sample(x, w, b)
        jax.block_until_ready((out, alpha, y_beta))

        ref_out, ref_alpha, ref_ybeta = _reference(x, w, b)
        assert jnp.allclose(out, ref_out, atol=1e-5, rtol=1e-5)
        assert jnp.allclose(alpha, ref_alpha, atol=1e-5, rtol=1e-5)
        assert jnp.allclose(y_beta, ref_ybeta, atol=1e-4, rtol=1e-4)

    key = jax.random.PRNGKey(0)
    k1, k2 = jax.random.split(key)
    _run_case(k1, B=2, C=4, H=16, W=16, F_out=8)    # MXU path (F >= 8), tiny C
    _run_case(k2, B=3, C=16, H=8, W=8, F_out=16)    # larger C, odd batch count
    print("KERNEL_OK")
</pallas_src>

<mosaic_0001>
module attributes {stable_mosaic.version = 11 : i64} {
  func.func @_attention_sample_kernel(%arg0: i32, %arg1: memref<2x4x256xf32, #tpu.memory_space<vmem>>, %arg2: memref<8x4xf32, #tpu.memory_space<vmem>>, %arg3: memref<1x8xf32, #tpu.memory_space<vmem>>, %arg4: memref<2x4x1xf32, #tpu.memory_space<vmem>>, %arg5: memref<2x1x256xf32, #tpu.memory_space<vmem>>, %arg6: memref<2x256x8xf32, #tpu.memory_space<vmem>>) attributes {dimension_semantics = [#tpu.dimension_semantics<parallel>], iteration_bounds = array<i64: 1>, scalar_prefetch = 0 : i64, scratch_operands = 0 : i64, tpu.core_type = #tpu.core_type<tc>, window_params = [{transform_indices = @transform_0, window_bounds = array<i64: 2, 4, 256>}, {pipeline_mode = #tpu.pipeline_mode<synchronous>, transform_indices = @transform_1, window_bounds = array<i64: 8, 4>}, {pipeline_mode = #tpu.pipeline_mode<synchronous>, transform_indices = @transform_2, window_bounds = array<i64: 1, 8>}, {transform_indices = @transform_3, window_bounds = array<i64: 2, 4, 1>}, {transform_indices = @transform_4, window_bounds = array<i64: 2, 1, 256>}, {transform_indices = @transform_5, window_bounds = array<i64: 2, 256, 8>}]} {
    %c0 = arith.constant 0 : index
    %c0_0 = arith.constant 0 : index
    %c0_1 = arith.constant 0 : index
    %0 = vector.load %arg1[%c0, %c0_0, %c0_1] : memref<2x4x256xf32, #tpu.memory_space<vmem>>, vector<2x4x256xf32>
    %c0_2 = arith.constant 0 : index
    %c0_3 = arith.constant 0 : index
    %1 = vector.load %arg2[%c0_2, %c0_3] : memref<8x4xf32, #tpu.memory_space<vmem>>, vector<8x4xf32>
    %c0_4 = arith.constant 0 : index
    %c0_5 = arith.constant 0 : index
    %2 = vector.load %arg3[%c0_4, %c0_5] : memref<1x8xf32, #tpu.memory_space<vmem>>, vector<1x8xf32>
    %3 = vector.extract_strided_slice %0 {offsets = [0, 0, 0], sizes = [1, 4, 256], strides = [1, 1, 1]} : vector<2x4x256xf32> to vector<1x4x256xf32>
    %4 = vector.shape_cast %3 : vector<1x4x256xf32> to vector<4x256xf32>
    %cst = arith.constant dense<0.000000e+00> : vector<8x256xf32>
    %5 = tpu.matmul %1, %4, %cst {dimension_numbers = #tpu.dot_dimension_numbers<[1], [0], [0], [1], [0, 0, 1, 1], [], []>} : vector<8x4xf32>, vector<4x256xf32>, vector<8x256xf32> -> vector<8x256xf32>
    %6 = tpu.transpose %5, [1, 0] : vector<8x256xf32> -> vector<256x8xf32>
    %7 = vector.broadcast %2 : vector<1x8xf32> to vector<256x8xf32>
    %8 = arith.addf %6, %7 : vector<256x8xf32>
    %c0_6 = arith.constant 0 : index
    %c0_7 = arith.constant 0 : index
    %c0_8 = arith.constant 0 : index
    %9 = vector.load %arg6[%c0_6, %c0_7, %c0_8] : memref<2x256x8xf32, #tpu.memory_space<vmem>>, vector<1x256x8xf32>
    %10 = vector.shape_cast %9 : vector<1x256x8xf32> to vector<256x8xf32>
    %11 = vector.shape_cast %8 : vector<256x8xf32> to vector<1x256x8xf32>
    tpu.vector_store %arg6[%c0_6, %c0_7, %c0_8], %11 {strides = array<i32>} : memref<2x256x8xf32, #tpu.memory_space<vmem>>, vector<1x256x8xf32>,
    %12 = vector.extract_strided_slice %0 {offsets = [1, 0, 0], sizes = [1, 4, 256], strides = [1, 1, 1]} : vector<2x4x256xf32> to vector<1x4x256xf32>
    %13 = vector.shape_cast %12 : vector<1x4x256xf32> to vector<4x256xf32>
    %cst_9 = arith.constant dense<0.000000e+00> : vector<8x256xf32>
    %14 = tpu.matmul %1, %13, %cst_9 {dimension_numbers = #tpu.dot_dimension_numbers<[1], [0], [0], [1], [0, 0, 1, 1], [], []>} : vector<8x4xf32>, vector<4x256xf32>, vector<8x256xf32> -> vector<8x256xf32>
    %15 = tpu.transpose %14, [1, 0] : vector<8x256xf32> -> vector<256x8xf32>
    %16 = vector.broadcast %2 : vector<1x8xf32> to vector<256x8xf32>
    %17 = arith.addf %15, %16 : vector<256x8xf32>
    %c1 = arith.constant 1 : index
    %c0_10 = arith.constant 0 : index
    %c0_11 = arith.constant 0 : index
    %18 = vector.load %arg6[%c1, %c0_10, %c0_11] : memref<2x256x8xf32, #tpu.memory_space<vmem>>, vector<1x256x8xf32>
    %19 = vector.shape_cast %18 : vector<1x256x8xf32> to vector<256x8xf32>
    %20 = vector.shape_cast %17 : vector<256x8xf32> to vector<1x256x8xf32>
    tpu.vector_store %arg6[%c1, %c0_10, %c0_11], %20 {strides = array<i32>} : memref<2x256x8xf32, #tpu.memory_space<vmem>>, vector<1x256x8xf32>,
    %21 = arith.mulf %0, %0 : vector<2x4x256xf32>
    %cst_12 = arith.constant dense<0.000000e+00> : vector<2x256xf32>
    %22 = vector.multi_reduction <add>, %21, %cst_12 [1] : vector<2x4x256xf32> to vector<2x256xf32>
    %23 = vector.shape_cast %22 : vector<2x256xf32> to vector<2x1x256xf32>
    %24 = math.sqrt %23 : vector<2x1x256xf32>
    %cst_13 = arith.constant dense<0.000000e+00> : vector<2x1xf32>
    %25 = vector.multi_reduction <add>, %24, %cst_13 [2] : vector<2x1x256xf32> to vector<2x1xf32>
    %26 = vector.shape_cast %25 : vector<2x1xf32> to vector<2x1x1xf32>
    %cst_14 = arith.constant 1.000000e+00 : f32
    %27 = vector.broadcast %cst_14 : f32 to vector<2x1x1xf32>
    %28 = arith.divf %27, %26 : vector<2x1x1xf32>
    %29 = vector.broadcast %28 : vector<2x1x1xf32> to vector<2x1x256xf32>
    %30 = arith.mulf %24, %29 : vector<2x1x256xf32>
    %cst_15 = arith.constant 3.906250e-04 : f32
    %31 = vector.broadcast %cst_15 : f32 to vector<2x1x256xf32>
    %32 = arith.subf %30, %31 : vector<2x1x256xf32>
    %cst_16 = arith.constant 0.000000e+00 : f32
    %33 = vector.broadcast %cst_16 : f32 to vector<2x1x256xf32>
    %34 = arith.maximumf %32, %33 : vector<2x1x256xf32>
    %cst_17 = arith.constant dense<0.000000e+00> : vector<2x1xf32>
    %35 = vector.multi_reduction <add>, %34, %cst_17 [2] : vector<2x1x256xf32> to vector<2x1xf32>
    %36 = vector.shape_cast %35 : vector<2x1xf32> to vector<2x1x1xf32>
    %cst_18 = arith.constant 1.000000e+00 : f32
    %37 = vector.broadcast %cst_18 : f32 to vector<2x1x1xf32>
    %38 = arith.divf %37, %36 : vector<2x1x1xf32>
    %39 = vector.broadcast %38 : vector<2x1x1xf32> to vector<2x1x256xf32>
    %40 = arith.mulf %34, %39 : vector<2x1x256xf32>
    %c0_19 = arith.constant 0 : index
    %c0_20 = arith.constant 0 : index
    %c0_21 = arith.constant 0 : index
    %41 = vector.load %arg5[%c0_19, %c0_20, %c0_21] : memref<2x1x256xf32, #tpu.memory_space<vmem>>, vector<2x1x256xf32>
    tpu.vector_store %arg5[%c0_19, %c0_20, %c0_21], %40 {strides = array<i32>} : memref<2x1x256xf32, #tpu.memory_space<vmem>>, vector<2x1x256xf32>,
    %42 = vector.broadcast %40 : vector<2x1x256xf32> to vector<2x4x256xf32>
    %43 = arith.mulf %42, %0 : vector<2x4x256xf32>
    %cst_22 = arith.constant dense<0.000000e+00> : vector<2x4xf32>
    %44 = vector.multi_reduction <add>, %43, %cst_22 [2] : vector<2x4x256xf32> to vector<2x4xf32>
    %45 = vector.shape_cast %44 : vector<2x4xf32> to vector<2x4x1xf32>
    %c0_23 = arith.constant 0 : index
    %c0_24 = arith.constant 0 : index
    %c0_25 = arith.constant 0 : index
    %46 = vector.load %arg4[%c0_23, %c0_24, %c0_25] : memref<2x4x1xf32, #tpu.memory_space<vmem>>, vector<2x4x1xf32>
    tpu.vector_store %arg4[%c0_23, %c0_24, %c0_25], %45 {strides = array<i32>} : memref<2x4x1xf32, #tpu.memory_space<vmem>>, vector<2x4x1xf32>,
    return
  }
  func.func @transform_0(%arg0: i32) -> (i32, i32, i32) {
    %c0_i32 = arith.constant 0 : i32
    %c0_i32_0 = arith.constant 0 : i32
    %c0_i32_1 = arith.constant 0 : i32
    return %arg0, %c0_i32, %c0_i32_0 : i32, i32, i32
  }
  func.func @transform_1(%arg0: i32) -> (i32, i32) {
    %c0_i32 = arith.constant 0 : i32
    %c0_i32_0 = arith.constant 0 : i32
    %c0_i32_1 = arith.constant 0 : i32
    return %c0_i32, %c0_i32_0 : i32, i32
  }
  func.func @transform_2(%arg0: i32) -> (i32, i32) {
    %c0_i32 = arith.constant 0 : i32
    %c0_i32_0 = arith.constant 0 : i32
    %c0_i32_1 = arith.constant 0 : i32
    return %c0_i32, %c0_i32_0 : i32, i32
  }
  func.func @transform_3(%arg0: i32) -> (i32, i32, i32) {
    %c0_i32 = arith.constant 0 : i32
    %c0_i32_0 = arith.constant 0 : i32
    %c0_i32_1 = arith.constant 0 : i32
    return %arg0, %c0_i32, %c0_i32_0 : i32, i32, i32
  }
  func.func @transform_4(%arg0: i32) -> (i32, i32, i32) {
    %c0_i32 = arith.constant 0 : i32
    %c0_i32_0 = arith.constant 0 : i32
    %c0_i32_1 = arith.constant 0 : i32
    return %arg0, %c0_i32, %c0_i32_0 : i32, i32, i32
  }
  func.func @transform_5(%arg0: i32) -> (i32, i32, i32) {
    %c0_i32 = arith.constant 0 : i32
    %c0_i32_0 = arith.constant 0 : i32
    %c0_i32_1 = arith.constant 0 : i32
    return %arg0, %c0_i32, %c0_i32_0 : i32, i32, i32
  }
}

</mosaic_0001>

<llo_original>
// kernel: tpu_custom_call.1
$region0: #{tpu_custom_call.1}
  #allocation0 [shape = 'u32[]', space=smem, size = 0x4, offset = 0x4, fixed_abs, tag = 'smem constant byte address 0x4 - core index']
  #allocation1 [shape = 'u32[72,128]{1,0:T(1,128)}', space=vmem, size = 0x9000, scoped, tag = 'internal scratch']
  %s0 = inlined_call_operand.hbm [shape: f32[2,4,256], index: 0, kind: input, shape index: {}]
  %s1 = inlined_call_operand.vmem [shape: f32[8,4], index: 1, kind: input, shape index: {}]
  %s2 = inlined_call_operand.vmem [shape: f32[1,8], index: 2, kind: input, shape index: {}]
  %s3 = inlined_call_operand.vmem [shape: f32[2,4,1], index: 3, kind: output, shape index: {0}]
  %s4 = inlined_call_operand.hbm [shape: f32[2,1,256], index: 4, kind: output, shape index: {1}]
  %s5 = inlined_call_operand.vmem [shape: f32[2,256,8], index: 5, kind: output, shape index: {2}]
  %6 = xla_tuple %s3, %s4, %s5
  %s7 = sld [smem:[#allocation0]]
  $region42: #{tpu_custom_call.1} parent=0
    _
  %s9 = ssub.s32 1, %s7
  %s10 = scalar_select 0, %s9, %s7
  $region1: #{tpu_custom_call.1} parent=0
    #allocation2 [shape = 'u8[8192]{0}', space=vmem, size = 0x2000, scoped, tag = 'input window, operand 0, single buffered']
    #allocation3 [shape = 's32[1]{0}', space=sflag, size = 0x4, scoped, tag = 'scoped memory for tpu_custom_call.1']
    #allocation4 [shape = 's32[1]{0}', space=sflag, size = 0x4, scoped, tag = 'scoped memory for tpu_custom_call.1']
    #allocation5 [shape = 'u8[2048]{0}', space=vmem, size = 0x800, scoped, tag = 'output window, operand 1, single buffered']
    %11 = vsyncpa [#allocation3], 0
    %12 = vsyncpa [#allocation4], 0
    // Predicated region
    $region2: #{tpu_custom_call.1} parent=1 // pred_check
      _
    $region3: #{tpu_custom_call.1} parent=1 // pred_check_branch
      %14 = sbr.rel (0) target = $region5
    $region4: #{tpu_custom_call.1} parent=1 // pred_region
      %16 = vsyncadd [#allocation3], 0
      %s17 = sshll.u32 %s0, 4
      %s18 = int_to_ptr.hbm [resolvable:$true] %s17
      %s19 = sshll.u32 [#allocation2], 4
      %s20 = int_to_ptr.vmem [resolvable:$true] %s19
      %25 = dma.hbm_to_vmem [thread:$0]  %s18, 256, %s20, [#allocation3], 128, 128, 8
    $region5: #{tpu_custom_call.1} parent=1 // pred_fallthru
      _
    // Predicated region
    $region6: #{tpu_custom_call.1} parent=1 // pred_check
      _
    $region7: #{tpu_custom_call.1} parent=1 // pred_check_branch
      %27 = sbr.rel (0) target = $region9
    $region8: #{tpu_custom_call.1} parent=1 // pred_region
      _
    $region9: #{tpu_custom_call.1} parent=1 // pred_fallthru
      _
    // Predicated region
    $region10: #{tpu_custom_call.1} parent=1 // pred_check
      _
    $region11: #{tpu_custom_call.1} parent=1 // pred_check_branch
      %29 = sbr.rel (0) target = $region13
    $region12: #{tpu_custom_call.1} parent=1 // pred_region
      _
    $region13: #{tpu_custom_call.1} parent=1 // pred_fallthru
      _
    // Predicated region
    $region14: #{tpu_custom_call.1} parent=1 // pred_check
      _
    $region15: #{tpu_custom_call.1} parent=1 // pred_check_branch
      %31 = sbr.rel (0) target = $region17
    $region16: #{tpu_custom_call.1} parent=1 // pred_region
      %33 = dma.done [#allocation3], 256
    $region17: #{tpu_custom_call.1} parent=1 // pred_fallthru
      _
    %v34 = vld [vmem:[#allocation2] sm:$0xff]
    %v35 = vld [vmem:[#allocation2 + $0x8] sm:$0xff]
    %v36 = vld [vmem:[%s1] sm:$0xff]
    %v37 = vld [vmem:[%s2] sm:$0x1]
    %39 = vst [vmem:[#allocation1] ss:$2 sm:$0xff] %v34
    %v40 = vld.sshfl [vmem:[#allocation1] sm:$0xff pattern:$0x75316420]
    %v41 = vld.sshfl [vmem:[#allocation1 + $0x8] sm:$0xff pattern:$0x75316420]
    %vm42 = vcmask 31744
    %v44 = vsel %vm42, %v36, 0
    %vm46 = vcmask 1043456
    %v47 = vsel %vm46, %v40, 0
    %v49 = vsel %vm46, %v41, 0
    %51 = vmatpush.msra.mxu0 0.0
    %52 = vmatpush.msra.mxu0 0.0
    %53 = vmatpush.msra.mxu0 0.0
    %54 = vmatpush.msra.mxu0 0.0
    %55 = vmatpush.msra.mxu0 0.0
    %56 = vmatpush.msra.mxu0 0.0
    %57 = vmatpush.msra.mxu0 0.0
    %58 = vmatpush.msra.mxu0 0.0
    %59 = vmatpush.msra.mxu0 0.0
    %60 = vmatpush.msra.mxu0 0.0
    %61 = vmatpush.msra.mxu0 0.0
    %62 = vmatpush.msra.mxu0 0.0
    %63 = vmatpush.msra.mxu0 0.0
    %64 = vmatpush.msra.mxu0 0.0
    %65 = vmatpush.msra.mxu0 0.0
    %66 = vmatpush.msra.mxu0 %v47
    %67 = vmatmul.f32.gmra.mxu0 %v44
    %v68 = vpop.f32.mrf.mxu0
    %v69 = vadd.f32 0.0, %v68
    %70 = vdwg.mxu0
    %71 = vmatpush.msra.mxu0 0.0
    %72 = vmatpush.msra.mxu0 0.0
    %73 = vmatpush.msra.mxu0 0.0
    %74 = vmatpush.msra.mxu0 0.0
    %75 = vmatpush.msra.mxu0 0.0
    %76 = vmatpush.msra.mxu0 0.0
    %77 = vmatpush.msra.mxu0 0.0
    %78 = vmatpush.msra.mxu0 0.0
    %79 = vmatpush.msra.mxu0 0.0
    %80 = vmatpush.msra.mxu0 0.0
    %81 = vmatpush.msra.mxu0 0.0
    %82 = vmatpush.msra.mxu0 0.0
    %83 = vmatpush.msra.mxu0 0.0
    %84 = vmatpush.msra.mxu0 0.0
    %85 = vmatpush.msra.mxu0 0.0
    %86 = vmatpush.msra.mxu0 %v49
    %87 = vmatmul.f32.gmra.mxu0 %v44
    %v88 = vpop.f32.mrf.mxu0
    %v89 = vadd.f32 0.0, %v88
    %90 = vdwg.mxu0
    %91 = vxpose.xlu0.b32.start [1/16] %v69, 128
    %92 = vxpose.xlu0.b32.cont [2/16] 0.0, 128
    %93 = vxpose.xlu0.b32.cont [3/16] 0.0, 128
    %94 = vxpose.xlu0.b32.cont [4/16] 0.0, 128
    %95 = vxpose.xlu0.b32.cont [5/16] 0.0, 128
    %96 = vxpose.xlu0.b32.cont [6/16] 0.0, 128
    %97 = vxpose.xlu0.b32.cont [7/16] 0.0, 128
    %98 = vxpose.xlu0.b32.cont [8/16] 0.0, 128
    %99 = vxpose.xlu0.b32.cont [9/16] 0.0, 128
    %100 = vxpose.xlu0.b32.cont [10/16] 0.0, 128
    %101 = vxpose.xlu0.b32.cont [11/16] 0.0, 128
    %102 = vxpose.xlu0.b32.cont [12/16] 0.0, 128
    %103 = vxpose.xlu0.b32.cont [13/16] 0.0, 128
    %104 = vxpose.xlu0.b32.cont [14/16] 0.0, 128
    %105 = vxpose.xlu0.b32.cont [15/16] 0.0, 128
    %106 = vxpose.xlu0.b32.end [16/16] 0.0, 128
    %v107 = vpop.trf.xlu0
    %v108 = vpop.trf.xlu0
    %v109 = vpop.trf.xlu0
    %v110 = vpop.trf.xlu0
    %v111 = vpop.trf.xlu0
    %v112 = vpop.trf.xlu0
    %v113 = vpop.trf.xlu0
    %v114 = vpop.trf.xlu0
    %v115 = vpop.trf.xlu0
    %v116 = vpop.trf.xlu0
    %v117 = vpop.trf.xlu0
    %v118 = vpop.trf.xlu0
    %v119 = vpop.trf.xlu0
    %v120 = vpop.trf.xlu0
    %v121 = vpop.trf.xlu0
    %v122 = vpop.trf.xlu0
    %123 = vxpose.xlu0.b32.start [1/16] %v89, 128
    %124 = vxpose.xlu0.b32.cont [2/16] 0.0, 128
    %125 = vxpose.xlu0.b32.cont [3/16] 0.0, 128
    %126 = vxpose.xlu0.b32.cont [4/16] 0.0, 128
    %127 = vxpose.xlu0.b32.cont [5/16] 0.0, 128
    %128 = vxpose.xlu0.b32.cont [6/16] 0.0, 128
    %129 = vxpose.xlu0.b32.cont [7/16] 0.0, 128
    %130 = vxpose.xlu0.b32.cont [8/16] 0.0, 128
    %131 = vxpose.xlu0.b32.cont [9/16] 0.0, 128
    %132 = vxpose.xlu0.b32.cont [10/16] 0.0, 128
    %133 = vxpose.xlu0.b32.cont [11/16] 0.0, 128
    %134 = vxpose.xlu0.b32.cont [12/16] 0.0, 128
    %135 = vxpose.xlu0.b32.cont [13/16] 0.0, 128
    %136 = vxpose.xlu0.b32.cont [14/16] 0.0, 128
    %137 = vxpose.xlu0.b32.cont [15/16] 0.0, 128
    %138 = vxpose.xlu0.b32.end [16/16] 0.0, 128
    %v139 = vpop.trf.xlu0
    %v140 = vpop.trf.xlu0
    %v141 = vpop.trf.xlu0
    %v142 = vpop.trf.xlu0
    %v143 = vpop.trf.xlu0
    %v144 = vpop.trf.xlu0
    %v145 = vpop.trf.xlu0
    %v146 = vpop.trf.xlu0
    %v147 = vpop.trf.xlu0
    %v148 = vpop.trf.xlu0
    %v149 = vpop.trf.xlu0
    %v150 = vpop.trf.xlu0
    %v151 = vpop.trf.xlu0
    %v152 = vpop.trf.xlu0
    %v153 = vpop.trf.xlu0
    %v154 = vpop.trf.xlu0
    %v156 = vperm.slane %v37, 0
    %v158 = vadd.f32 %v107, %v156
    %v159 = vadd.f32 %v108, %v156
    %v160 = vadd.f32 %v109, %v156
    %v161 = vadd.f32 %v110, %v156
    %v162 = vadd.f32 %v111, %v156
    %v163 = vadd.f32 %v112, %v156
    %v164 = vadd.f32 %v113, %v156
    %v165 = vadd.f32 %v114, %v156
    %v166 = vadd.f32 %v115, %v156
    %v167 = vadd.f32 %v116, %v156
    %v168 = vadd.f32 %v117, %v156
    %v169 = vadd.f32 %v118, %v156
    %v170 = vadd.f32 %v119, %v156
    %v171 = vadd.f32 %v120, %v156
    %v172 = vadd.f32 %v121, %v156
    %v173 = vadd.f32 %v122, %v156
    %v174 = vadd.f32 %v139, %v156
    %v175 = vadd.f32 %v140, %v156
    %v176 = vadd.f32 %v141, %v156
    %v177 = vadd.f32 %v142, %v156
    %v178 = vadd.f32 %v143, %v156
    %v179 = vadd.f32 %v144, %v156
    %v180 = vadd.f32 %v145, %v156
    %v181 = vadd.f32 %v146, %v156
    %v182 = vadd.f32 %v147, %v156
    %v183 = vadd.f32 %v148, %v156
    %v184 = vadd.f32 %v149, %v156
    %v185 = vadd.f32 %v150, %v156
    %v186 = vadd.f32 %v151, %v156
    %v187 = vadd.f32 %v152, %v156
    %v188 = vadd.f32 %v153, %v156
    %v189 = vadd.f32 %v154, %v156
    %vm190 = vcmask 64512
    %191 = vst.msk [vmem:[%s5] sm:$0xff] %vm190, %v158
    %192 = vst.msk [vmem:[%s5 + $0x8] sm:$0xff] %vm190, %v159
    %193 = vst.msk [vmem:[%s5 + $0x10] sm:$0xff] %vm190, %v160
    %194 = vst.msk [vmem:[%s5 + $0x18] sm:$0xff] %vm190, %v161
    %195 = vst.msk [vmem:[%s5 + $0x20] sm:$0xff] %vm190, %v162
    %196 = vst.msk [vmem:[%s5 + $0x28] sm:$0xff] %vm190, %v163
    %197 = vst.msk [vmem:[%s5 + $0x30] sm:$0xff] %vm190, %v164
    %198 = vst.msk [vmem:[%s5 + $0x38] sm:$0xff] %vm190, %v165
    %199 = vst.msk [vmem:[%s5 + $0x40] sm:$0xff] %vm190, %v166
    %200 = vst.msk [vmem:[%s5 + $0x48] sm:$0xff] %vm190, %v167
    %201 = vst.msk [vmem:[%s5 + $0x50] sm:$0xff] %vm190, %v168
    %202 = vst.msk [vmem:[%s5 + $0x58] sm:$0xff] %vm190, %v169
    %203 = vst.msk [vmem:[%s5 + $0x60] sm:$0xff] %vm190, %v170
    %204 = vst.msk [vmem:[%s5 + $0x68] sm:$0xff] %vm190, %v171
    %205 = vst.msk [vmem:[%s5 + $0x70] sm:$0xff] %vm190, %v172
    %206 = vst.msk [vmem:[%s5 + $0x78] sm:$0xff] %vm190, %v173
    %207 = vst.msk [vmem:[%s5 + $0x80] sm:$0xff] %vm190, %v174
    %208 = vst.msk [vmem:[%s5 + $0x88] sm:$0xff] %vm190, %v175
    %209 = vst.msk [vmem:[%s5 + $0x90] sm:$0xff] %vm190, %v176
    %210 = vst.msk [vmem:[%s5 + $0x98] sm:$0xff] %vm190, %v177
    %211 = vst.msk [vmem:[%s5 + $0xa0] sm:$0xff] %vm190, %v178
    %212 = vst.msk [vmem:[%s5 + $0xa8] sm:$0xff] %vm190, %v179
    %213 = vst.msk [vmem:[%s5 + $0xb0] sm:$0xff] %vm190, %v180
    %214 = vst.msk [vmem:[%s5 + $0xb8] sm:$0xff] %vm190, %v181
    %215 = vst.msk [vmem:[%s5 + $0xc0] sm:$0xff] %vm190, %v182
    %216 = vst.msk [vmem:[%s5 + $0xc8] sm:$0xff] %vm190, %v183
    %217 = vst.msk [vmem:[%s5 + $0xd0] sm:$0xff] %vm190, %v184
    %218 = vst.msk [vmem:[%s5 + $0xd8] sm:$0xff] %vm190, %v185
    %219 = vst.msk [vmem:[%s5 + $0xe0] sm:$0xff] %vm190, %v186
    %220 = vst.msk [vmem:[%s5 + $0xe8] sm:$0xff] %vm190, %v187
    %221 = vst.msk [vmem:[%s5 + $0xf0] sm:$0xff] %vm190, %v188
    %222 = vst.msk [vmem:[%s5 + $0xf8] sm:$0xff] %vm190, %v189
    %224 = vst [vmem:[#allocation1] ss:$2 sm:$0xff] %v35
    %v225 = vld.sshfl [vmem:[#allocation1] sm:$0xff pattern:$0x75316420]
    %v226 = vld.sshfl [vmem:[#allocation1 + $0x8] sm:$0xff pattern:$0x75316420]
    %v227 = vsel %vm46, %v225, 0
    %v229 = vsel %vm46, %v226, 0
    %231 = vmatpush.msra.mxu0 0.0
    %232 = vmatpush.msra.mxu0 0.0
    %233 = vmatpush.msra.mxu0 0.0
    %234 = vmatpush.msra.mxu0 0.0
    %235 = vmatpush.msra.mxu0 0.0
    %236 = vmatpush.msra.mxu0 0.0
    %237 = vmatpush.msra.mxu0 0.0
    %238 = vmatpush.msra.mxu0 0.0
    %239 = vmatpush.msra.mxu0 0.0
    %240 = vmatpush.msra.mxu0 0.0
    %241 = vmatpush.msra.mxu0 0.0
    %242 = vmatpush.msra.mxu0 0.0
    %243 = vmatpush.msra.mxu0 0.0
    %244 = vmatpush.msra.mxu0 0.0
    %245 = vmatpush.msra.mxu0 0.0
    %246 = vmatpush.msra.mxu0 %v227
    %247 = vmatmul.f32.gmra.mxu0 %v44
    %v248 = vpop.f32.mrf.mxu0
    %v249 = vadd.f32 0.0, %v248
    %250 = vdwg.mxu0
    %251 = vmatpush.msra.mxu0 0.0
    %252 = vmatpush.msra.mxu0 0.0
    %253 = vmatpush.msra.mxu0 0.0
    %254 = vmatpush.msra.mxu0 0.0
    %255 = vmatpush.msra.mxu0 0.0
    %256 = vmatpush.msra.mxu0 0.0
    %257 = vmatpush.msra.mxu0 0.0
    %258 = vmatpush.msra.mxu0 0.0
    %259 = vmatpush.msra.mxu0 0.0
    %260 = vmatpush.msra.mxu0 0.0
    %261 = vmatpush.msra.mxu0 0.0
    %262 = vmatpush.msra.mxu0 0.0
    %263 = vmatpush.msra.mxu0 0.0
    %264 = vmatpush.msra.mxu0 0.0
    %265 = vmatpush.msra.mxu0 0.0
    %266 = vmatpush.msra.mxu0 %v229
    %267 = vmatmul.f32.gmra.mxu0 %v44
    %v268 = vpop.f32.mrf.mxu0
    %v269 = vadd.f32 0.0, %v268
    %270 = vdwg.mxu0
    %271 = vxpose.xlu0.b32.start [1/16] %v249, 128
    %272 = vxpose.xlu0.b32.cont [2/16] 0.0, 128
    %273 = vxpose.xlu0.b32.cont [3/16] 0.0, 128
    %274 = vxpose.xlu0.b32.cont [4/16] 0.0, 128
    %275 = vxpose.xlu0.b32.cont [5/16] 0.0, 128
    %276 = vxpose.xlu0.b32.cont [6/16] 0.0, 128
    %277 = vxpose.xlu0.b32.cont [7/16] 0.0, 128
    %278 = vxpose.xlu0.b32.cont [8/16] 0.0, 128
    %279 = vxpose.xlu0.b32.cont [9/16] 0.0, 128
    %280 = vxpose.xlu0.b32.cont [10/16] 0.0, 128
    %281 = vxpose.xlu0.b32.cont [11/16] 0.0, 128
    %282 = vxpose.xlu0.b32.cont [12/16] 0.0, 128
    %283 = vxpose.xlu0.b32.cont [13/16] 0.0, 128
    %284 = vxpose.xlu0.b32.cont [14/16] 0.0, 128
    %285 = vxpose.xlu0.b32.cont [15/16] 0.0, 128
    %286 = vxpose.xlu0.b32.end [16/16] 0.0, 128
    %v287 = vpop.trf.xlu0
    %v288 = vpop.trf.xlu0
    %v289 = vpop.trf.xlu0
    %v290 = vpop.trf.xlu0
    %v291 = vpop.trf.xlu0
    %v292 = vpop.trf.xlu0
    %v293 = vpop.trf.xlu0
    %v294 = vpop.trf.xlu0
    %v295 = vpop.trf.xlu0
    %v296 = vpop.trf.xlu0
    %v297 = vpop.trf.xlu0
    %v298 = vpop.trf.xlu0
    %v299 = vpop.trf.xlu0
    %v300 = vpop.trf.xlu0
    %v301 = vpop.trf.xlu0
    %v302 = vpop.trf.xlu0
    %303 = vxpose.xlu0.b32.start [1/16] %v269, 128
    %304 = vxpose.xlu0.b32.cont [2/16] 0.0, 128
    %305 = vxpose.xlu0.b32.cont [3/16] 0.0, 128
    %306 = vxpose.xlu0.b32.cont [4/16] 0.0, 128
    %307 = vxpose.xlu0.b32.cont [5/16] 0.0, 128
    %308 = vxpose.xlu0.b32.cont [6/16] 0.0, 128
    %309 = vxpose.xlu0.b32.cont [7/16] 0.0, 128
    %310 = vxpose.xlu0.b32.cont [8/16] 0.0, 128
    %311 = vxpose.xlu0.b32.cont [9/16] 0.0, 128
    %312 = vxpose.xlu0.b32.cont [10/16] 0.0, 128
    %313 = vxpose.xlu0.b32.cont [11/16] 0.0, 128
    %314 = vxpose.xlu0.b32.cont [12/16] 0.0, 128
    %315 = vxpose.xlu0.b32.cont [13/16] 0.0, 128
    %316 = vxpose.xlu0.b32.cont [14/16] 0.0, 128
    %317 = vxpose.xlu0.b32.cont [15/16] 0.0, 128
    %318 = vxpose.xlu0.b32.end [16/16] 0.0, 128
    %v319 = vpop.trf.xlu0
    %v320 = vpop.trf.xlu0
    %v321 = vpop.trf.xlu0
    %v322 = vpop.trf.xlu0
    %v323 = vpop.trf.xlu0
    %v324 = vpop.trf.xlu0
    %v325 = vpop.trf.xlu0
    %v326 = vpop.trf.xlu0
    %v327 = vpop.trf.xlu0
    %v328 = vpop.trf.xlu0
    %v329 = vpop.trf.xlu0
    %v330 = vpop.trf.xlu0
    %v331 = vpop.trf.xlu0
    %v332 = vpop.trf.xlu0
    %v333 = vpop.trf.xlu0
    %v334 = vpop.trf.xlu0
    %v335 = vadd.f32 %v287, %v156
    %v336 = vadd.f32 %v288, %v156
    %v337 = vadd.f32 %v289, %v156
    %v338 = vadd.f32 %v290, %v156
    %v339 = vadd.f32 %v291, %v156
    %v340 = vadd.f32 %v292, %v156
    %v341 = vadd.f32 %v293, %v156
    %v342 = vadd.f32 %v294, %v156
    %v343 = vadd.f32 %v295, %v156
    %v344 = vadd.f32 %v296, %v156
    %v345 = vadd.f32 %v297, %v156
    %v346 = vadd.f32 %v298, %v156
    %v347 = vadd.f32 %v299, %v156
    %v348 = vadd.f32 %v300, %v156
    %v349 = vadd.f32 %v301, %v156
    %v350 = vadd.f32 %v302, %v156
    %v351 = vadd.f32 %v319, %v156
    %v352 = vadd.f32 %v320, %v156
    %v353 = vadd.f32 %v321, %v156
    %v354 = vadd.f32 %v322, %v156
    %v355 = vadd.f32 %v323, %v156
    %v356 = vadd.f32 %v324, %v156
    %v357 = vadd.f32 %v325, %v156
    %v358 = vadd.f32 %v326, %v156
    %v359 = vadd.f32 %v327, %v156
    %v360 = vadd.f32 %v328, %v156
    %v361 = vadd.f32 %v329, %v156
    %v362 = vadd.f32 %v330, %v156
    %v363 = vadd.f32 %v331, %v156
    %v364 = vadd.f32 %v332, %v156
    %v365 = vadd.f32 %v333, %v156
    %v366 = vadd.f32 %v334, %v156
    %s367 = scalar_lea.vmem %s5, 256
    %368 = vst.msk [vmem:[%s367] sm:$0xff] %vm190, %v335
    %369 = vst.msk [vmem:[%s367 + $0x8] sm:$0xff] %vm190, %v336
    %370 = vst.msk [vmem:[%s367 + $0x10] sm:$0xff] %vm190, %v337
    %371 = vst.msk [vmem:[%s367 + $0x18] sm:$0xff] %vm190, %v338
    %372 = vst.msk [vmem:[%s367 + $0x20] sm:$0xff] %vm190, %v339
    %373 = vst.msk [vmem:[%s367 + $0x28] sm:$0xff] %vm190, %v340
    %374 = vst.msk [vmem:[%s367 + $0x30] sm:$0xff] %vm190, %v341
    %375 = vst.msk [vmem:[%s367 + $0x38] sm:$0xff] %vm190, %v342
    %376 = vst.msk [vmem:[%s367 + $0x40] sm:$0xff] %vm190, %v343
    %377 = vst.msk [vmem:[%s367 + $0x48] sm:$0xff] %vm190, %v344
    %378 = vst.msk [vmem:[%s367 + $0x50] sm:$0xff] %vm190, %v345
    %379 = vst.msk [vmem:[%s367 + $0x58] sm:$0xff] %vm190, %v346
    %380 = vst.msk [vmem:[%s367 + $0x60] sm:$0xff] %vm190, %v347
    %381 = vst.msk [vmem:[%s367 + $0x68] sm:$0xff] %vm190, %v348
    %382 = vst.msk [vmem:[%s367 + $0x70] sm:$0xff] %vm190, %v349
    %383 = vst.msk [vmem:[%s367 + $0x78] sm:$0xff] %vm190, %v350
    %384 = vst.msk [vmem:[%s367 + $0x80] sm:$0xff] %vm190, %v351
    %385 = vst.msk [vmem:[%s367 + $0x88] sm:$0xff] %vm190, %v352
    %386 = vst.msk [vmem:[%s367 + $0x90] sm:$0xff] %vm190, %v353
    %387 = vst.msk [vmem:[%s367 + $0x98] sm:$0xff] %vm190, %v354
    %388 = vst.msk [vmem:[%s367 + $0xa0] sm:$0xff] %vm190, %v355
    %389 = vst.msk [vmem:[%s367 + $0xa8] sm:$0xff] %vm190, %v356
    %390 = vst.msk [vmem:[%s367 + $0xb0] sm:$0xff] %vm190, %v357
    %391 = vst.msk [vmem:[%s367 + $0xb8] sm:$0xff] %vm190, %v358
    %392 = vst.msk [vmem:[%s367 + $0xc0] sm:$0xff] %vm190, %v359
    %393 = vst.msk [vmem:[%s367 + $0xc8] sm:$0xff] %vm190, %v360
    %394 = vst.msk [vmem:[%s367 + $0xd0] sm:$0xff] %vm190, %v361
    %395 = vst.msk [vmem:[%s367 + $0xd8] sm:$0xff] %vm190, %v362
    %396 = vst.msk [vmem:[%s367 + $0xe0] sm:$0xff] %vm190, %v363
    %397 = vst.msk [vmem:[%s367 + $0xe8] sm:$0xff] %vm190, %v364
    %398 = vst.msk [vmem:[%s367 + $0xf0] sm:$0xff] %vm190, %v365
    %399 = vst.msk [vmem:[%s367 + $0xf8] sm:$0xff] %vm190, %v366
    %v400 = vmul.f32 %v34, %v34
    %v401 = vmul.f32 %v35, %v35
    %404 = vst [vmem:[#allocation1] ss:$2 sm:$0xff] %v400
    %v405 = vld.sshfl [vmem:[#allocation1] sm:$0xff pattern:$0x75316420]
    %v406 = vld.sshfl [vmem:[#allocation1 + $0x8] sm:$0xff pattern:$0x75316420]
    %s407 = scalar_lea.vmem [#allocation1], 16
    %408 = vst [vmem:[%s407] ss:$2 sm:$0xff] %v401
    %v409 = vld.sshfl [vmem:[#allocation1 + $0x10] sm:$0xff pattern:$0x75316420]
    %v410 = vld.sshfl [vmem:[#allocation1 + $0x18] sm:$0xff pattern:$0x75316420]
    %v415 = vsel %vm46, %v405, 0.0
    %v416 = vrot.slane %v415, 4
    %v417 = vadd.f32 %v415, %v416
    %v418 = vrot.slane %v417, 2
    %v419 = vadd.f32 %v417, %v418
    %v420 = vrot.slane %v419, 1
    %v421 = vadd.f32 %v419, %v420
    %v422 = vsel %vm46, %v406, 0.0
    %v423 = vrot.slane %v422, 4
    %v424 = vadd.f32 %v422, %v423
    %v425 = vrot.slane %v424, 2
    %v426 = vadd.f32 %v424, %v425
    %v427 = vrot.slane %v426, 1
    %v428 = vadd.f32 %v426, %v427
    %v429 = vsel %vm46, %v409, 0.0
    %v430 = vrot.slane %v429, 4
    %v431 = vadd.f32 %v429, %v430
    %v432 = vrot.slane %v431, 2
    %v433 = vadd.f32 %v431, %v432
    %v434 = vrot.slane %v433, 1
    %v435 = vadd.f32 %v433, %v434
    %v436 = vsel %vm46, %v410, 0.0
    %v437 = vrot.slane %v436, 4
    %v438 = vadd.f32 %v436, %v437
    %v439 = vrot.slane %v438, 2
    %v440 = vadd.f32 %v438, %v439
    %v441 = vrot.slane %v440, 1
    %v442 = vadd.f32 %v440, %v441
    %v443 = vrsqrt.pop %v421
    %v444 = vmul.f32 %v443, %v421
    %v445 = vmul.f32 %v444, %v443
    %v446 = vmul.f32 0.5, %v445
    %v447 = vsub.f32 1.5, %v446
    %v448 = vmul.f32 %v443, %v447
    %v449 = vmul.f32 %v421, %v448
    %vm450 = vcmp.eq.f32.partialorder %v421, inf
    %v451 = vsel %vm450, %v421, %v449
    %vm452 = vcmp.eq.f32.partialorder %v421, 0.0
    %v453 = vand.u32 %v421, 2147483648
    %v454 = vsel %vm452, %v453, %v451
    %v455 = vrsqrt.pop %v428
    %v456 = vmul.f32 %v455, %v428
    %v457 = vmul.f32 %v456, %v455
    %v458 = vmul.f32 0.5, %v457
    %v459 = vsub.f32 1.5, %v458
    %v460 = vmul.f32 %v455, %v459
    %v461 = vmul.f32 %v428, %v460
    %vm462 = vcmp.eq.f32.partialorder %v428, inf
    %v463 = vsel %vm462, %v428, %v461
    %vm464 = vcmp.eq.f32.partialorder %v428, 0.0
    %v465 = vand.u32 %v428, 2147483648
    %v466 = vsel %vm464, %v465, %v463
    %v467 = vrsqrt.pop %v435
    %v468 = vmul.f32 %v467, %v435
    %v469 = vmul.f32 %v468, %v467
    %v470 = vmul.f32 0.5, %v469
    %v471 = vsub.f32 1.5, %v470
    %v472 = vmul.f32 %v467, %v471
    %v473 = vmul.f32 %v435, %v472
    %vm474 = vcmp.eq.f32.partialorder %v435, inf
    %v475 = vsel %vm474, %v435, %v473
    %vm476 = vcmp.eq.f32.partialorder %v435, 0.0
    %v477 = vand.u32 %v435, 2147483648
    %v478 = vsel %vm476, %v477, %v475
    %v479 = vrsqrt.pop %v442
    %v480 = vmul.f32 %v479, %v442
    %v481 = vmul.f32 %v480, %v479
    %v482 = vmul.f32 0.5, %v481
    %v483 = vsub.f32 1.5, %v482
    %v484 = vmul.f32 %v479, %v483
    %v485 = vmul.f32 %v442, %v484
    %vm486 = vcmp.eq.f32.partialorder %v442, inf
    %v487 = vsel %vm486, %v442, %v485
    %vm488 = vcmp.eq.f32.partialorder %v442, 0.0
    %v489 = vand.u32 %v442, 2147483648
    %v490 = vsel %vm488, %v489, %v487
    %v491 = vadd.f32 %v454, %v466
    %492 = vadd.xlane.f32.xlu0 %v491
    %v493 = vpop.xlane.xlu0 %492
    %v494 = vadd.f32 %v478, %v490
    %495 = vadd.xlane.f32.xlu0 %v494
    %v496 = vpop.xlane.xlu0 %495
    %v497 = vrcp.pop %v493
    %v498 = vmul.f32 %v493, %v497
    %v499 = vsub.f32 1.0, %v498
    %v500 = vmul.f32 %v497, %v499
    %v501 = vadd.f32 %v497, %v500
    %vm502 = vweird.f32 %v493
    %vm503 = vweird.f32 %v497
    %vm504 = vmor %vm502, %vm503
    %v505 = vsel %vm504, %v497, %v501
    %v506 = vand.u32 2147483647, %v493
    %vm507 = vcmp.eq.f32.partialorder %v506, 8.507059e+37
    %v508 = vand.u32 %v493, 2147483648
    %v509 = vor.u32 1.1754944e-38, %v508
    %v510 = vsel %vm507, %v509, %v505
    %v511 = vmul.f32 1.0, %v510
    %v512 = vrcp.pop %v496
    %v513 = vmul.f32 %v496, %v512
    %v514 = vsub.f32 1.0, %v513
    %v515 = vmul.f32 %v512, %v514
    %v516 = vadd.f32 %v512, %v515
    %vm517 = vweird.f32 %v496
    %vm518 = vweird.f32 %v512
    %vm519 = vmor %vm517, %vm518
    %v520 = vsel %vm519, %v512, %v516
    %v521 = vand.u32 2147483647, %v496
    %vm522 = vcmp.eq.f32.partialorder %v521, 8.507059e+37
    %v523 = vand.u32 %v496, 2147483648
    %v524 = vor.u32 1.1754944e-38, %v523
    %v525 = vsel %vm522, %v524, %v520
    %v526 = vmul.f32 1.0, %v525
    %v527 = vmul.f32 %v454, %v511
    %v528 = vmul.f32 %v466, %v511
    %v529 = vmul.f32 %v478, %v526
    %v530 = vmul.f32 %v490, %v526
    %v531 = vsub.f32 %v527, 0.000390625
    %v532 = vsub.f32 %v528, 0.000390625
    %v533 = vsub.f32 %v529, 0.000390625
    %v534 = vsub.f32 %v530, 0.000390625
    %v535 = vmax.f32 %v531, 0.0
    %v536 = vmax.f32 %v532, 0.0
    %v537 = vmax.f32 %v533, 0.0
    %v538 = vmax.f32 %v534, 0.0
    %v539 = vadd.f32 %v535, %v536
    %540 = vadd.xlane.f32.xlu0 %v539
    %v541 = vpop.xlane.xlu0 %540
    %v542 = vadd.f32 %v537, %v538
    %543 = vadd.xlane.f32.xlu0 %v542
    %v544 = vpop.xlane.xlu0 %543
    %v545 = vrcp.pop %v541
    %v546 = vmul.f32 %v541, %v545
    %v547 = vsub.f32 1.0, %v546
    %v548 = vmul.f32 %v545, %v547
    %v549 = vadd.f32 %v545, %v548
    %vm550 = vweird.f32 %v541
    %vm551 = vweird.f32 %v545
    %vm552 = vmor %vm550, %vm551
    %v553 = vsel %vm552, %v545, %v549
    %v554 = vand.u32 2147483647, %v541
    %vm555 = vcmp.eq.f32.partialorder %v554, 8.507059e+37
    %v556 = vand.u32 %v541, 2147483648
    %v557 = vor.u32 1.1754944e-38, %v556
    %v558 = vsel %vm555, %v557, %v553
    %v559 = vmul.f32 1.0, %v558
    %v560 = vrcp.pop %v544
    %v561 = vmul.f32 %v544, %v560
    %v562 = vsub.f32 1.0, %v561
    %v563 = vmul.f32 %v560, %v562
    %v564 = vadd.f32 %v560, %v563
    %vm565 = vweird.f32 %v544
    %vm566 = vweird.f32 %v560
    %vm567 = vmor %vm565, %vm566
    %v568 = vsel %vm567, %v560, %v564
    %v569 = vand.u32 2147483647, %v544
    %vm570 = vcmp.eq.f32.partialorder %v569, 8.507059e+37
    %v571 = vand.u32 %v544, 2147483648
    %v572 = vor.u32 1.1754944e-38, %v571
    %v573 = vsel %vm570, %v572, %v568
    %v574 = vmul.f32 1.0, %v573
    %v575 = vmul.f32 %v535, %v559
    %v576 = vmul.f32 %v536, %v559
    %v577 = vmul.f32 %v537, %v574
    %v578 = vmul.f32 %v538, %v574
    %v583 = vrot.slane %v576, 7
    %v584 = vrot.slane %v578, 7
    %vm585 = vcmask 1040384
    %v586 = vsel %vm585, %v575, %v583
    %v587 = vsel %vm585, %v577, %v584
    %v590 = vlaneseq
    %vm591 = vcmp.ge.s32.totalorder %v590, 0
    %vm592 = vcmp.lt.s32.totalorder %v590, 256
    %vm593 = vmand %vm591, %vm592
    %594 = vst.msk [vmem:[#allocation5] sm:$0x3] %vm593, %v586
    %595 = vst.msk [vmem:[#allocation5 + $0x2] sm:$0x3] %vm593, %v587
    %596 = vst [vmem:[#allocation1] ss:$2 sm:$0xff] %v34
    %v597 = vld.sshfl [vmem:[#allocation1] sm:$0xff pattern:$0x75316420]
    %v598 = vld.sshfl [vmem:[#allocation1 + $0x8] sm:$0xff pattern:$0x75316420]
    %s599 = scalar_lea.vmem [#allocation1], 16
    %600 = vst [vmem:[%s599] ss:$2 sm:$0xff] %v35
    %v601 = vld.sshfl [vmem:[#allocation1 + $0x10] sm:$0xff pattern:$0x75316420]
    %v602 = vld.sshfl [vmem:[#allocation1 + $0x18] sm:$0xff pattern:$0x75316420]
    %v607 = vmul.f32 %v575, %v597
    %v608 = vmul.f32 %v576, %v598
    %v609 = vmul.f32 %v577, %v601
    %v610 = vmul.f32 %v578, %v602
    %v611 = vsel %vm46, %v607, 0.0
    %v612 = vsel %vm46, %v608, 0.0
    %v613 = vadd.f32 %v611, %v612
    %614 = vadd.xlane.f32.xlu0 %v613
    %v615 = vpop.xlane.xlu0 %614
    %v616 = vsel %vm46, %v609, 0.0
    %v617 = vsel %vm46, %v610, 0.0
    %v618 = vadd.f32 %v616, %v617
    %619 = vadd.xlane.f32.xlu0 %v618
    %v620 = vpop.xlane.xlu0 %619
    %vm621 = vcmask 3072
    %622 = vst.msk [vmem:[%s3] sm:$0xf] %vm621, %v615
    %623 = vst.msk [vmem:[%s3 + $0x4] sm:$0xf] %vm621, %v620
    // Predicated region
    $region18: #{tpu_custom_call.1} parent=1 // pred_check
      _
    $region19: #{tpu_custom_call.1} parent=1 // pred_check_branch
      %625 = sbr.rel (0) target = $region21
    $region20: #{tpu_custom_call.1} parent=1 // pred_region
      _
    $region21: #{tpu_custom_call.1} parent=1 // pred_fallthru
      _
    // Predicated region
    $region22: #{tpu_custom_call.1} parent=1 // pred_check
      _
    $region23: #{tpu_custom_call.1} parent=1 // pred_check_branch
      %627 = sbr.rel (0) target = $region25
    $region24: #{tpu_custom_call.1} parent=1 // pred_region
      %629 = vsyncadd [#allocation4], 0
      %s630 = sshll.u32 [#allocation5], 4
      %s631 = int_to_ptr.vmem [resolvable:$true] %s630
      %s632 = sshll.u32 %s4, 4
      %s633 = int_to_ptr.hbm [resolvable:$true] %s632
      %638 = dma.vmem_to_hbm [thread:$0]  %s631, 64, %s633, [#allocation4], 32, 32, 2
    $region25: #{tpu_custom_call.1} parent=1 // pred_fallthru
      _
    // Predicated region
    $region26: #{tpu_custom_call.1} parent=1 // pred_check
      _
    $region27: #{tpu_custom_call.1} parent=1 // pred_check_branch
      %640 = sbr.rel (0) target = $region29
    $region28: #{tpu_custom_call.1} parent=1 // pred_region
      _
    $region29: #{tpu_custom_call.1} parent=1 // pred_fallthru
      _
    // Predicated region
    $region30: #{tpu_custom_call.1} parent=1 // pred_check
      _
    $region31: #{tpu_custom_call.1} parent=1 // pred_check_branch
      %642 = sbr.rel (0) target = $region33
    $region32: #{tpu_custom_call.1} parent=1 // pred_region
      _
    $region33: #{tpu_custom_call.1} parent=1 // pred_fallthru
      _
    // Predicated region
    $region34: #{tpu_custom_call.1} parent=1 // pred_check
      _
    $region35: #{tpu_custom_call.1} parent=1 // pred_check_branch
      %644 = sbr.rel (0) target = $region37
    $region36: #{tpu_custom_call.1} parent=1 // pred_region
      %646 = dma.done [#allocation4], 64
    $region37: #{tpu_custom_call.1} parent=1 // pred_fallthru
      _
    // Predicated region
    $region38: #{tpu_custom_call.1} parent=1 // pred_check
      _
    $region39: #{tpu_custom_call.1} parent=1 // pred_check_branch
      %648 = sbr.rel (0) target = $region41
    $region40: #{tpu_custom_call.1} parent=1 // pred_region
      _
    $region41: #{tpu_custom_call.1} parent=1 // pred_fallthru
      _
    %649 = vsyncpa [#allocation3], 1
    %650 = vsyncpa [#allocation4], 1

</llo_original>
